<compile_context>
chip_gen: v6e
topology: v6e:2x2x1
jax: 0.10.0
libtpu: 0.0.40
codegen_flags: <defaults>
</compile_context>

<pallas_src>
import functools
import math

import numpy as np
import jax
import jax.numpy as jnp
from jax.experimental import pallas as pl
from jax.experimental.pallas import tpu as pltpu


def _erf(x):
    # Abramowitz & Stegun 7.1.26 rational approximation (max abs err ~1.5e-7).
    a1, a2, a3, a4, a5 = 0.254829592, -0.284496736, 1.421413741, -1.453152027, 1.061405429
    p = 0.3275911
    z = jnp.abs(x)
    t = pl.reciprocal(1.0 + p * z, approx=True)      # EUP slot, frees the VALU
    poly = ((((a5 * t + a4) * t + a3) * t + a2) * t + a1) * t
    y = 1.0 - poly * jnp.exp(-z * z)
    return jnp.where(x >= 0, y, -y)


def _gelu_exact(x):
    # Matches torch.nn.functional.gelu default (erf-based, non-approximate).
    return 0.5 * x * (1.0 + _erf(x * (1.0 / math.sqrt(2.0))))


def _default_compute_dtype():
    # bf16 VPU/EUP exists on v6e/v7x; keep f32 elementwise on v5e and anything
    # we cannot identify (bf16 there would not help and f32 is always correct).
    try:
        kind = jax.devices()[0].device_kind.lower()
    except Exception:
        return jnp.float32
    if ("v6" in kind) or ("v7" in kind) or ("7x" in kind):
        return jnp.bfloat16
    return jnp.float32


def _pick_rows_per_tile(H, W, target_lanes=8192):
    """Largest divisor of H whose tile lane-width stays under target_lanes."""
    best = 1
    for tr in range(1, H + 1):
        if H % tr == 0 and tr * W <= target_lanes:
            best = tr
    return best


def _ffn_kernel(W, TR, LWp, x_ref, masks_ref, w_in_ref, b_in_ref,
                w_dw_ref, b_dw_ref, w_out_ref, b_out_ref, o_ref):
    cdt = w_dw_ref.dtype
    hid2 = w_in_ref.shape[0]
    hid = hid2 // 2
    TRW = TR * W
    t = pl.program_id(1)
    nT = pl.num_programs(1)

    # ---- window read: padded-image rows [r0, r0+TR+2) == image rows [r0-1, r0+TR] ----
    start = t * TRW
    if TRW % 128 == 0:
        start = pl.multiple_of(start, 128)
    xw = x_ref[:, pl.ds(start, LWp)]                                  # (C, LWp)

    # ---- project_in: 1x1 conv == channel matmul (bf16 MXU operands, f32 acc) ----
    y = jnp.dot(w_in_ref[...], xw.astype(jnp.bfloat16),
                preferred_element_type=jnp.float32) + b_in_ref[...]   # (hid2, LWp) f32
    y = y.astype(cdt)

    # ---- depthwise 3x3 (padding=1): 9 lane-rolled taps over the window ----
    # Zero-pad semantics for the dwconv input: the halo row that falls outside
    # the image (top row of the first tile / bottom row of the last tile) must
    # contribute zero -> one source-side multiply, gated by scalar tile flags.
    isf = jnp.where(t == 0, 1.0, 0.0).astype(cdt)
    isl = jnp.where(t == nT - 1, 1.0, 0.0).astype(cdt)
    drop = masks_ref[2:3, :] * isf + masks_ref[3:4, :] * isl          # (1, LWp)
    y0 = y * (1.0 - drop)
    # Separable column masks, applied once to the SOURCE instead of per tap:
    # a dw=-1 tap must never read a source pixel in column W-1 (that lane is
    # the previous row's last pixel after flattening), symmetrically for dw=+1.
    y_m1 = y0 * masks_ref[0:1, :]                                     # sources for dw=-1 taps
    y_p1 = y0 * masks_ref[1:2, :]                                     # sources for dw=+1 taps

    w_dw = w_dw_ref[...]                                              # (hid2, 9)
    # Center tap (k=4) starts the accumulator, fused with the dwconv bias.
    acc = y0 * w_dw[:, 4:5] + b_dw_ref[...]
    k = 0
    for dh in (-1, 0, 1):
        for dw in (-1, 0, 1):
            if not (dh == 0 and dw == 0):
                src = y_m1 if dw == -1 else (y_p1 if dw == 1 else y0)
                s = dh * W + dw
                acc = acc + pltpu.roll(src, shift=(-s) % LWp, axis=1) * w_dw[:, k:k + 1]
            k += 1

    # ---- gating on the TR output rows only (window rows 1..TR) ----
    # TODO(synk): run the erf-GELU in bf16 on v6e/v7x if the EUP becomes the
    # binding slot after the bf16 dwconv; kept in f32 here for accuracy.
    a32 = acc[:, W:W + TRW].astype(jnp.float32)                       # (hid2, TRW)
    g = _gelu_exact(a32[:hid, :]) * a32[hid:, :]                      # (hid, TRW) f32

    # ---- project_out: 1x1 conv == channel matmul ----
    out = jnp.dot(w_out_ref[...], g.astype(jnp.bfloat16),
                  preferred_element_type=jnp.float32) + b_out_ref[...]  # (C, TRW)
    o_ref[...] = out.astype(o_ref.dtype)                              # lane-dense store


def feedforward_pallas(x_nchw, w_in, b_in, w_dw, b_dw, w_out, b_out, *,
                       rows_per_tile=None, compute_dtype=None):
    """x_nchw: (B, C, H, W).  Weight layouts (channels-first, kernel-friendly):
         w_in  (hid2, C),  b_in  (hid2, 1)   [torch project_in  weight (hid2, C, 1, 1)]
         w_dw  (hid2, 9),  b_dw  (hid2, 1)   [torch dwconv      weight (hid2, 1, 3, 3)]
         w_out (C, hid),   b_out (C, 1)      [torch project_out weight (C, hid, 1, 1)]
    """
    B, C, H, W = x_nchw.shape
    HW = H * W
    hid2 = w_in.shape[0]
    hid = hid2 // 2
    out_dtype = x_nchw.dtype

    cdt = compute_dtype if compute_dtype is not None else _default_compute_dtype()

    TR = rows_per_tile if rows_per_tile is not None else _pick_rows_per_tile(H, W)
    assert H % TR == 0, "rows_per_tile must divide H"
    nT = H // TR
    TRW = TR * W
    LW = (TR + 2) * W                       # window: tile rows + 1 halo row each side
    LWp = ((LW + 127) // 128) * 128         # lane-aligned window so rolls/loads stay aligned
    extra = LWp - LW

    # One zero image-row of halo on each side of the flattened spatial axis, plus
    # `extra` zero lanes so every tile's fixed-size window read stays in bounds.
    x_flat = x_nchw.reshape(B, C, HW).astype(cdt)          # bf16 activation I/O on v6e/v7x
    x_pad = jnp.pad(x_flat, ((0, 0), (0, 0), (W, W + extra)))
    XL = x_pad.shape[-1]

    # Tiny static mask table (fetched once; constant index_map):
    #  row 0: keep-mask for dw=-1 sources (0 at column W-1),  row 1: for dw=+1 (0 at column 0)
    #  row 2: indicator of window row 0 (top halo),           row 3: indicator of window row TR+1
    col = np.arange(LW) % W
    masks_np = np.zeros((4, LWp), np.float32)
    masks_np[0, :LW] = (col != W - 1)
    masks_np[1, :LW] = (col != 0)
    masks_np[2, :LW] = (np.arange(LW) < W)
    masks_np[3, :LW] = (np.arange(LW) >= (TR + 1) * W)
    masks = jnp.asarray(masks_np).astype(cdt)

    # Weight / bias dtypes: MXU operands bf16, dwconv taps in the compute dtype,
    # bias adds after the matmuls stay f32.
    w_in_b = w_in.astype(jnp.bfloat16)
    w_out_b = w_out.astype(jnp.bfloat16)
    w_dw_c = w_dw.astype(cdt)
    b_dw_c = b_dw.astype(cdt)
    b_in_f = b_in.astype(jnp.float32)
    b_out_f = b_out.astype(jnp.float32)

    flops = B * nT * (2 * C * hid2 * LWp + 18 * hid2 * LWp) + B * HW * (2 * hid * C + 12 * hid)
    bytes_accessed = (B * C * XL * jnp.dtype(cdt).itemsize
                      + B * C * HW * jnp.dtype(out_dtype).itemsize
                      + 2 * (hid2 * C + C * hid) + 4 * (11 * hid2 + 2 * C)
                      + 4 * LWp * jnp.dtype(cdt).itemsize)
    cost = pl.CostEstimate(flops=int(flops),
                           transcendentals=int(2 * B * HW * hid),
                           bytes_accessed=int(bytes_accessed))

    out = pl.pallas_call(
        functools.partial(_ffn_kernel, W, TR, LWp),
        out_shape=jax.ShapeDtypeStruct((B, C, HW), out_dtype),
        grid_spec=pltpu.PrefetchScalarGridSpec(
            num_scalar_prefetch=0,
            grid=(B, nT),
            in_specs=[
                pl.BlockSpec((None, C, XL), lambda b, t: (b, 0, 0)),   # x (full, resident per batch)
                pl.BlockSpec((4, LWp), lambda b, t: (0, 0)),           # static masks
                pl.BlockSpec((hid2, C), lambda b, t: (0, 0)),          # w_in  (bf16)
                pl.BlockSpec((hid2, 1), lambda b, t: (0, 0)),          # b_in  (f32)
                pl.BlockSpec((hid2, 9), lambda b, t: (0, 0)),          # w_dw  (compute dtype)
                pl.BlockSpec((hid2, 1), lambda b, t: (0, 0)),          # b_dw  (compute dtype)
                pl.BlockSpec((C, hid), lambda b, t: (0, 0)),           # w_out (bf16)
                pl.BlockSpec((C, 1), lambda b, t: (0, 0)),             # b_out (f32)
            ],
            out_specs=pl.BlockSpec((None, C, TRW), lambda b, t: (b, 0, t)),
        ),
        compiler_params=pltpu.CompilerParams(
            dimension_semantics=("parallel", "parallel"),
            vmem_limit_bytes=48 * 1024 * 1024),   # > 16/32 MiB scoped defaults, < v7x 64 MiB physical
        cost_estimate=cost,
    )(x_pad, masks, w_in_b, b_in_f, w_dw_c, b_dw_c, w_out_b, b_out_f)
    return out.reshape(B, C, H, W)


def feedforward_reference(x_nchw, w_in, b_in, w_dw, b_dw, w_out, b_out):
    # Pure-JAX (f32) reference mirroring the PyTorch forward, NCHW.
    B, C, H, W = x_nchw.shape
    hid2 = w_in.shape[0]
    hid = hid2 // 2
    y = jnp.einsum('oc,bchw->bohw', w_in, x_nchw) + b_in.reshape(1, hid2, 1, 1)
    yp = jnp.pad(y, ((0, 0), (0, 0), (1, 1), (1, 1)))
    acc = jnp.zeros_like(y)
    k = 0
    for dh in range(3):
        for dw in range(3):
            acc = acc + yp[:, :, dh:dh + H, dw:dw + W] * w_dw[:, k].reshape(1, hid2, 1, 1)
            k += 1
    acc = acc + b_dw.reshape(1, hid2, 1, 1)
    x1, x2 = acc[:, :hid], acc[:, hid:]
    g = jax.nn.gelu(x1, approximate=False) * x2
    return jnp.einsum('oc,bchw->bohw', w_out, g) + b_out.reshape(1, C, 1, 1)


if __name__ == "__main__":
    # Module config: dim=4, ffn_expansion_factor=2, bias=True -> hidden=8, hidden*2=16
    B, C, H, W = 2, 4, 16, 16
    hid = int(C * 2)
    hid2 = 2 * hid

    key = jax.random.PRNGKey(0)
    kx, k1, k2, k3, k4, k5, k6 = jax.random.split(key, 7)

    x_nchw = jax.random.normal(kx, (B, C, H, W), jnp.float32)

    # Deterministic synthetic parameters (Conv2d weights in kernel-friendly layouts).
    w_in = 0.2 * jax.random.normal(k1, (hid2, C), jnp.float32)
    b_in = 0.1 * jax.random.normal(k2, (hid2, 1), jnp.float32)
    w_dw = 0.2 * jax.random.normal(k3, (hid2, 9), jnp.float32)
    b_dw = 0.1 * jax.random.normal(k4, (hid2, 1), jnp.float32)
    w_out = 0.2 * jax.random.normal(k5, (C, hid), jnp.float32)
    b_out = 0.1 * jax.random.normal(k6, (C, 1), jnp.float32)

    # rows_per_tile=8 -> 2 row tiles per image, so the halo / boundary logic of the
    # new spatial tiling axis is exercised and validated against the reference.
    out = feedforward_pallas(x_nchw, w_in, b_in, w_dw, b_dw, w_out, b_out,
                             rows_per_tile=8)
    jax.block_until_ready(out)

    ref = feedforward_reference(x_nchw, w_in, b_in, w_dw, b_dw, w_out, b_out)
    assert out.shape == (B, C, H, W)
    # Tolerance sized for bf16 MXU operands, bf16 dwconv taps (on v6e/v7x) and the
    # approximate EUP reciprocal inside the erf.
    assert jnp.allclose(out, ref, rtol=1e-2, atol=2e-2), "mismatch vs reference"

    print("KERNEL_OK")
</pallas_src>

<mosaic_0001>
module attributes {stable_mosaic.version = 11 : i64} {
  func.func @_ffn_kernel(%arg0: i32, %arg1: i32, %arg2: memref<1x4x384xf32, #tpu.memory_space<vmem>>, %arg3: memref<4x256xf32, #tpu.memory_space<vmem>>, %arg4: memref<16x4xbf16, #tpu.memory_space<vmem>>, %arg5: memref<16x1xf32, #tpu.memory_space<vmem>>, %arg6: memref<16x9xf32, #tpu.memory_space<vmem>>, %arg7: memref<16x1xf32, #tpu.memory_space<vmem>>, %arg8: memref<4x8xbf16, #tpu.memory_space<vmem>>, %arg9: memref<4x1xf32, #tpu.memory_space<vmem>>, %arg10: memref<1x4x128xf32, #tpu.memory_space<vmem>>) attributes {dimension_semantics = [#tpu.dimension_semantics<parallel>, #tpu.dimension_semantics<parallel>], iteration_bounds = array<i64: 2, 2>, scalar_prefetch = 0 : i64, scratch_operands = 0 : i64, tpu.core_type = #tpu.core_type<tc>, window_params = [{transform_indices = @transform_0, window_bounds = array<i64: 1, 4, 384>}, {pipeline_mode = #tpu.pipeline_mode<synchronous>, transform_indices = @transform_1, window_bounds = array<i64: 4, 256>}, {pipeline_mode = #tpu.pipeline_mode<synchronous>, transform_indices = @transform_2, window_bounds = array<i64: 16, 4>}, {pipeline_mode = #tpu.pipeline_mode<synchronous>, transform_indices = @transform_3, window_bounds = array<i64: 16, 1>}, {pipeline_mode = #tpu.pipeline_mode<synchronous>, transform_indices = @transform_4, window_bounds = array<i64: 16, 9>}, {pipeline_mode = #tpu.pipeline_mode<synchronous>, transform_indices = @transform_5, window_bounds = array<i64: 16, 1>}, {pipeline_mode = #tpu.pipeline_mode<synchronous>, transform_indices = @transform_6, window_bounds = array<i64: 4, 8>}, {pipeline_mode = #tpu.pipeline_mode<synchronous>, transform_indices = @transform_7, window_bounds = array<i64: 4, 1>}, {transform_indices = @transform_8, window_bounds = array<i64: 1, 4, 128>}]} {
    %c128_i32 = arith.constant 128 : i32
    %0 = arith.muli %arg1, %c128_i32 : i32
    %1 = tpu.assume_multiple %0, 128 : i32
    %c0 = arith.constant 0 : index
    %c0_0 = arith.constant 0 : index
    %2 = arith.index_cast %1 : i32 to index
    %3 = vector.load %arg2[%c0, %c0_0, %2] : memref<1x4x384xf32, #tpu.memory_space<vmem>>, vector<1x4x256xf32>
    %4 = vector.shape_cast %3 : vector<1x4x256xf32> to vector<4x256xf32>
    %c0_1 = arith.constant 0 : index
    %c0_2 = arith.constant 0 : index
    %5 = vector.load %arg4[%c0_1, %c0_2] : memref<16x4xbf16, #tpu.memory_space<vmem>>, vector<16x4xbf16>
    %6 = arith.truncf %4 : vector<4x256xf32> to vector<4x256xbf16>
    %cst = arith.constant dense<0.000000e+00> : vector<16x256xf32>
    %7 = tpu.matmul %5, %6, %cst {dimension_numbers = #tpu.dot_dimension_numbers<[1], [0], [0], [1], [0, 0, 1, 1], [], []>} : vector<16x4xbf16>, vector<4x256xbf16>, vector<16x256xf32> -> vector<16x256xf32>
    %c0_3 = arith.constant 0 : index
    %c0_4 = arith.constant 0 : index
    %8 = vector.load %arg5[%c0_3, %c0_4] : memref<16x1xf32, #tpu.memory_space<vmem>>, vector<16x1xf32>
    %9 = vector.broadcast %8 : vector<16x1xf32> to vector<16x256xf32>
    %10 = arith.addf %7, %9 : vector<16x256xf32>
    %c0_i32 = arith.constant 0 : i32
    %11 = arith.cmpi eq, %arg1, %c0_i32 : i32
    %cst_5 = arith.constant 1.000000e+00 : f32
    %cst_6 = arith.constant 0.000000e+00 : f32
    %12 = arith.select %11, %cst_5, %cst_6 : f32
    %c1_i32 = arith.constant 1 : i32
    %13 = arith.cmpi eq, %arg1, %c1_i32 : i32
    %cst_7 = arith.constant 1.000000e+00 : f32
    %cst_8 = arith.constant 0.000000e+00 : f32
    %14 = arith.select %13, %cst_7, %cst_8 : f32
    %c2 = arith.constant 2 : index
    %c0_9 = arith.constant 0 : index
    %15 = vector.load %arg3[%c2, %c0_9] : memref<4x256xf32, #tpu.memory_space<vmem>>, vector<1x256xf32>
    %16 = vector.broadcast %12 : f32 to vector<1x256xf32>
    %17 = arith.mulf %15, %16 : vector<1x256xf32>
    %c3 = arith.constant 3 : index
    %c0_10 = arith.constant 0 : index
    %18 = vector.load %arg3[%c3, %c0_10] : memref<4x256xf32, #tpu.memory_space<vmem>>, vector<1x256xf32>
    %19 = vector.broadcast %14 : f32 to vector<1x256xf32>
    %20 = arith.mulf %18, %19 : vector<1x256xf32>
    %21 = arith.addf %17, %20 : vector<1x256xf32>
    %cst_11 = arith.constant 1.000000e+00 : f32
    %22 = vector.broadcast %cst_11 : f32 to vector<1x256xf32>
    %23 = arith.subf %22, %21 : vector<1x256xf32>
    %24 = vector.broadcast %23 : vector<1x256xf32> to vector<16x256xf32>
    %25 = arith.mulf %10, %24 : vector<16x256xf32>
    %c0_12 = arith.constant 0 : index
    %c0_13 = arith.constant 0 : index
    %26 = vector.load %arg3[%c0_12, %c0_13] : memref<4x256xf32, #tpu.memory_space<vmem>>, vector<1x256xf32>
    %27 = vector.broadcast %26 : vector<1x256xf32> to vector<16x256xf32>
    %28 = arith.mulf %25, %27 : vector<16x256xf32>
    %c1 = arith.constant 1 : index
    %c0_14 = arith.constant 0 : index
    %29 = vector.load %arg3[%c1, %c0_14] : memref<4x256xf32, #tpu.memory_space<vmem>>, vector<1x256xf32>
    %30 = vector.broadcast %29 : vector<1x256xf32> to vector<16x256xf32>
    %31 = arith.mulf %25, %30 : vector<16x256xf32>
    %c0_15 = arith.constant 0 : index
    %c0_16 = arith.constant 0 : index
    %32 = vector.load %arg6[%c0_15, %c0_16] : memref<16x9xf32, #tpu.memory_space<vmem>>, vector<16x9xf32>
    %33 = vector.extract_strided_slice %32 {offsets = [0, 4], sizes = [16, 1], strides = [1, 1]} : vector<16x9xf32> to vector<16x1xf32>
    %34 = vector.broadcast %33 : vector<16x1xf32> to vector<16x256xf32>
    %35 = arith.mulf %25, %34 : vector<16x256xf32>
    %c0_17 = arith.constant 0 : index
    %c0_18 = arith.constant 0 : index
    %36 = vector.load %arg7[%c0_17, %c0_18] : memref<16x1xf32, #tpu.memory_space<vmem>>, vector<16x1xf32>
    %37 = vector.broadcast %36 : vector<16x1xf32> to vector<16x256xf32>
    %38 = arith.addf %35, %37 : vector<16x256xf32>
    %c17_i32 = arith.constant 17 : i32
    %39 = tpu.dynamic_rotate %28 by %c17_i32 dim 1 : vector<16x256xf32>, i32 -> vector<16x256xf32>
    %40 = vector.extract_strided_slice %32 {offsets = [0, 0], sizes = [16, 1], strides = [1, 1]} : vector<16x9xf32> to vector<16x1xf32>
    %41 = vector.broadcast %40 : vector<16x1xf32> to vector<16x256xf32>
    %42 = arith.mulf %39, %41 : vector<16x256xf32>
    %43 = arith.addf %38, %42 : vector<16x256xf32>
    %c16_i32 = arith.constant 16 : i32
    %44 = tpu.dynamic_rotate %25 by %c16_i32 dim 1 : vector<16x256xf32>, i32 -> vector<16x256xf32>
    %45 = vector.extract_strided_slice %32 {offsets = [0, 1], sizes = [16, 1], strides = [1, 1]} : vector<16x9xf32> to vector<16x1xf32>
    %46 = vector.broadcast %45 : vector<16x1xf32> to vector<16x256xf32>
    %47 = arith.mulf %44, %46 : vector<16x256xf32>
    %48 = arith.addf %43, %47 : vector<16x256xf32>
    %c15_i32 = arith.constant 15 : i32
    %49 = tpu.dynamic_rotate %31 by %c15_i32 dim 1 : vector<16x256xf32>, i32 -> vector<16x256xf32>
    %50 = vector.extract_strided_slice %32 {offsets = [0, 2], sizes = [16, 1], strides = [1, 1]} : vector<16x9xf32> to vector<16x1xf32>
    %51 = vector.broadcast %50 : vector<16x1xf32> to vector<16x256xf32>
    %52 = arith.mulf %49, %51 : vector<16x256xf32>
    %53 = arith.addf %48, %52 : vector<16x256xf32>
    %c1_i32_19 = arith.constant 1 : i32
    %54 = tpu.dynamic_rotate %28 by %c1_i32_19 dim 1 : vector<16x256xf32>, i32 -> vector<16x256xf32>
    %55 = vector.extract_strided_slice %32 {offsets = [0, 3], sizes = [16, 1], strides = [1, 1]} : vector<16x9xf32> to vector<16x1xf32>
    %56 = vector.broadcast %55 : vector<16x1xf32> to vector<16x256xf32>
    %57 = arith.mulf %54, %56 : vector<16x256xf32>
    %58 = arith.addf %53, %57 : vector<16x256xf32>
    %c255_i32 = arith.constant 255 : i32
    %59 = tpu.dynamic_rotate %31 by %c255_i32 dim 1 : vector<16x256xf32>, i32 -> vector<16x256xf32>
    %60 = vector.extract_strided_slice %32 {offsets = [0, 5], sizes = [16, 1], strides = [1, 1]} : vector<16x9xf32> to vector<16x1xf32>
    %61 = vector.broadcast %60 : vector<16x1xf32> to vector<16x256xf32>
    %62 = arith.mulf %59, %61 : vector<16x256xf32>
    %63 = arith.addf %58, %62 : vector<16x256xf32>
    %c241_i32 = arith.constant 241 : i32
    %64 = tpu.dynamic_rotate %28 by %c241_i32 dim 1 : vector<16x256xf32>, i32 -> vector<16x256xf32>
    %65 = vector.extract_strided_slice %32 {offsets = [0, 6], sizes = [16, 1], strides = [1, 1]} : vector<16x9xf32> to vector<16x1xf32>
    %66 = vector.broadcast %65 : vector<16x1xf32> to vector<16x256xf32>
    %67 = arith.mulf %64, %66 : vector<16x256xf32>
    %68 = arith.addf %63, %67 : vector<16x256xf32>
    %c240_i32 = arith.constant 240 : i32
    %69 = tpu.dynamic_rotate %25 by %c240_i32 dim 1 : vector<16x256xf32>, i32 -> vector<16x256xf32>
    %70 = vector.extract_strided_slice %32 {offsets = [0, 7], sizes = [16, 1], strides = [1, 1]} : vector<16x9xf32> to vector<16x1xf32>
    %71 = vector.broadcast %70 : vector<16x1xf32> to vector<16x256xf32>
    %72 = arith.mulf %69, %71 : vector<16x256xf32>
    %73 = arith.addf %68, %72 : vector<16x256xf32>
    %c239_i32 = arith.constant 239 : i32
    %74 = tpu.dynamic_rotate %31 by %c239_i32 dim 1 : vector<16x256xf32>, i32 -> vector<16x256xf32>
    %75 = vector.extract_strided_slice %32 {offsets = [0, 8], sizes = [16, 1], strides = [1, 1]} : vector<16x9xf32> to vector<16x1xf32>
    %76 = vector.broadcast %75 : vector<16x1xf32> to vector<16x256xf32>
    %77 = arith.mulf %74, %76 : vector<16x256xf32>
    %78 = arith.addf %73, %77 : vector<16x256xf32>
    %79 = vector.extract_strided_slice %78 {offsets = [0, 16], sizes = [16, 128], strides = [1, 1]} : vector<16x256xf32> to vector<16x128xf32>
    %80 = vector.extract_strided_slice %79 {offsets = [0, 0], sizes = [8, 128], strides = [1, 1]} : vector<16x128xf32> to vector<8x128xf32>
    %cst_20 = arith.constant 5.000000e-01 : f32
    %81 = vector.broadcast %cst_20 : f32 to vector<8x128xf32>
    %82 = arith.mulf %81, %80 : vector<8x128xf32>
    %cst_21 = arith.constant 0.707106769 : f32
    %83 = vector.broadcast %cst_21 : f32 to vector<8x128xf32>
    %84 = arith.mulf %80, %83 : vector<8x128xf32>
    %85 = math.absf %84 : vector<8x128xf32>
    %cst_22 = arith.constant 0.327591091 : f32
    %86 = vector.broadcast %cst_22 : f32 to vector<8x128xf32>
    %87 = arith.mulf %86, %85 : vector<8x128xf32>
    %cst_23 = arith.constant 1.000000e+00 : f32
    %88 = vector.broadcast %cst_23 : f32 to vector<8x128xf32>
    %89 = arith.addf %88, %87 : vector<8x128xf32>
    %90 = tpu.reciprocal %89 {approx = true} : vector<8x128xf32> -> vector<8x128xf32>
    %cst_24 = arith.constant 1.06140542 : f32
    %91 = vector.broadcast %cst_24 : f32 to vector<8x128xf32>
    %92 = arith.mulf %91, %90 : vector<8x128xf32>
    %cst_25 = arith.constant -1.45315206 : f32
    %93 = vector.broadcast %cst_25 : f32 to vector<8x128xf32>
    %94 = arith.addf %92, %93 : vector<8x128xf32>
    %95 = arith.mulf %94, %90 : vector<8x128xf32>
    %cst_26 = arith.constant 1.42141378 : f32
    %96 = vector.broadcast %cst_26 : f32 to vector<8x128xf32>
    %97 = arith.addf %95, %96 : vector<8x128xf32>
    %98 = arith.mulf %97, %90 : vector<8x128xf32>
    %cst_27 = arith.constant -0.284496725 : f32
    %99 = vector.broadcast %cst_27 : f32 to vector<8x128xf32>
    %100 = arith.addf %98, %99 : vector<8x128xf32>
    %101 = arith.mulf %100, %90 : vector<8x128xf32>
    %cst_28 = arith.constant 0.254829586 : f32
    %102 = vector.broadcast %cst_28 : f32 to vector<8x128xf32>
    %103 = arith.addf %101, %102 : vector<8x128xf32>
    %104 = arith.mulf %103, %90 : vector<8x128xf32>
    %cst_29 = arith.constant 0.000000e+00 : f32
    %105 = vector.broadcast %cst_29 : f32 to vector<8x128xf32>
    %106 = arith.subf %105, %85 : vector<8x128xf32>
    %107 = arith.mulf %106, %85 : vector<8x128xf32>
    %108 = math.exp %107 : vector<8x128xf32>
    %109 = arith.mulf %104, %108 : vector<8x128xf32>
    %cst_30 = arith.constant 1.000000e+00 : f32
    %110 = vector.broadcast %cst_30 : f32 to vector<8x128xf32>
    %111 = arith.subf %110, %109 : vector<8x128xf32>
    %cst_31 = arith.constant 0.000000e+00 : f32
    %112 = vector.broadcast %cst_31 : f32 to vector<8x128xf32>
    %113 = arith.cmpf oge, %84, %112 : vector<8x128xf32>
    %cst_32 = arith.constant 0.000000e+00 : f32
    %114 = vector.broadcast %cst_32 : f32 to vector<8x128xf32>
    %115 = arith.subf %114, %111 : vector<8x128xf32>
    %116 = arith.select %113, %111, %115 : vector<8x128xi1>, vector<8x128xf32>
    %cst_33 = arith.constant 1.000000e+00 : f32
    %117 = vector.broadcast %cst_33 : f32 to vector<8x128xf32>
    %118 = arith.addf %117, %116 : vector<8x128xf32>
    %119 = arith.mulf %82, %118 : vector<8x128xf32>
    %120 = vector.extract_strided_slice %79 {offsets = [8, 0], sizes = [8, 128], strides = [1, 1]} : vector<16x128xf32> to vector<8x128xf32>
    %121 = arith.mulf %119, %120 : vector<8x128xf32>
    %c0_34 = arith.constant 0 : index
    %c0_35 = arith.constant 0 : index
    %122 = vector.load %arg8[%c0_34, %c0_35] : memref<4x8xbf16, #tpu.memory_space<vmem>>, vector<4x8xbf16>
    %123 = arith.truncf %121 : vector<8x128xf32> to vector<8x128xbf16>
    %cst_36 = arith.constant dense<0.000000e+00> : vector<4x128xf32>
    %124 = tpu.matmul %122, %123, %cst_36 {dimension_numbers = #tpu.dot_dimension_numbers<[1], [0], [0], [1], [0, 0, 1, 1], [], []>} : vector<4x8xbf16>, vector<8x128xbf16>, vector<4x128xf32> -> vector<4x128xf32>
    %c0_37 = arith.constant 0 : index
    %c0_38 = arith.constant 0 : index
    %125 = vector.load %arg9[%c0_37, %c0_38] : memref<4x1xf32, #tpu.memory_space<vmem>>, vector<4x1xf32>
    %126 = vector.broadcast %125 : vector<4x1xf32> to vector<4x128xf32>
    %127 = arith.addf %124, %126 : vector<4x128xf32>
    %c0_39 = arith.constant 0 : index
    %c0_40 = arith.constant 0 : index
    %c0_41 = arith.constant 0 : index
    %128 = vector.load %arg10[%c0_39, %c0_40, %c0_41] : memref<1x4x128xf32, #tpu.memory_space<vmem>>, vector<1x4x128xf32>
    %129 = vector.shape_cast %128 : vector<1x4x128xf32> to vector<4x128xf32>
    %130 = vector.shape_cast %127 : vector<4x128xf32> to vector<1x4x128xf32>
    tpu.vector_store %arg10[%c0_39, %c0_40, %c0_41], %130 {strides = array<i32>} : memref<1x4x128xf32, #tpu.memory_space<vmem>>, vector<1x4x128xf32>,
    return
  }
  func.func @transform_0(%arg0: i32, %arg1: i32) -> (i32, i32, i32) {
    %c0_i32 = arith.constant 0 : i32
    %c0_i32_0 = arith.constant 0 : i32
    %c0_i32_1 = arith.constant 0 : i32
    return %arg0, %c0_i32, %c0_i32_0 : i32, i32, i32
  }
  func.func @transform_1(%arg0: i32, %arg1: i32) -> (i32, i32) {
    %c0_i32 = arith.constant 0 : i32
    %c0_i32_0 = arith.constant 0 : i32
    %c0_i32_1 = arith.constant 0 : i32
    return %c0_i32, %c0_i32_0 : i32, i32
  }
  func.func @transform_2(%arg0: i32, %arg1: i32) -> (i32, i32) {
    %c0_i32 = arith.constant 0 : i32
    %c0_i32_0 = arith.constant 0 : i32
    %c0_i32_1 = arith.constant 0 : i32
    return %c0_i32, %c0_i32_0 : i32, i32
  }
  func.func @transform_3(%arg0: i32, %arg1: i32) -> (i32, i32) {
    %c0_i32 = arith.constant 0 : i32
    %c0_i32_0 = arith.constant 0 : i32
    %c0_i32_1 = arith.constant 0 : i32
    return %c0_i32, %c0_i32_0 : i32, i32
  }
  func.func @transform_4(%arg0: i32, %arg1: i32) -> (i32, i32) {
    %c0_i32 = arith.constant 0 : i32
    %c0_i32_0 = arith.constant 0 : i32
    %c0_i32_1 = arith.constant 0 : i32
    return %c0_i32, %c0_i32_0 : i32, i32
  }
  func.func @transform_5(%arg0: i32, %arg1: i32) -> (i32, i32) {
    %c0_i32 = arith.constant 0 : i32
    %c0_i32_0 = arith.constant 0 : i32
    %c0_i32_1 = arith.constant 0 : i32
    return %c0_i32, %c0_i32_0 : i32, i32
  }
  func.func @transform_6(%arg0: i32, %arg1: i32) -> (i32, i32) {
    %c0_i32 = arith.constant 0 : i32
    %c0_i32_0 = arith.constant 0 : i32
    %c0_i32_1 = arith.constant 0 : i32
    return %c0_i32, %c0_i32_0 : i32, i32
  }
  func.func @transform_7(%arg0: i32, %arg1: i32) -> (i32, i32) {
    %c0_i32 = arith.constant 0 : i32
    %c0_i32_0 = arith.constant 0 : i32
    %c0_i32_1 = arith.constant 0 : i32
    return %c0_i32, %c0_i32_0 : i32, i32
  }
  func.func @transform_8(%arg0: i32, %arg1: i32) -> (i32, i32, i32) {
    %c0_i32 = arith.constant 0 : i32
    %c0_i32_0 = arith.constant 0 : i32
    return %arg0, %c0_i32, %arg1 : i32, i32, i32
  }
}

</mosaic_0001>

<llo_original>
// kernel: tpu_custom_call.1
$region0: #{tpu_custom_call.1}
  #allocation0 [shape = 'u32[]', space=smem, size = 0x4, offset = 0x4, fixed_abs, tag = 'smem constant byte address 0x4 - core index']
  #allocation1 [shape = 'u32[144,128]{1,0:T(1,128)}', space=vmem, size = 0x12000, scoped, tag = 'internal scratch']
  %s0 = inlined_call_operand.vmem [shape: f32[2,4,384], index: 0, kind: input, shape index: {}]
  %s1 = inlined_call_operand.vmem [shape: f32[4,256], index: 1, kind: input, shape index: {}]
  %s2 = inlined_call_operand.vmem [shape: bf16[16,4], index: 2, kind: input, shape index: {}]
  %s3 = inlined_call_operand.vmem [shape: f32[16,1], index: 3, kind: input, shape index: {}]
  %s4 = inlined_call_operand.vmem [shape: f32[16,9], index: 4, kind: input, shape index: {}]
  %s5 = inlined_call_operand.vmem [shape: f32[16,1], index: 5, kind: input, shape index: {}]
  %s6 = inlined_call_operand.vmem [shape: bf16[4,8], index: 6, kind: input, shape index: {}]
  %s7 = inlined_call_operand.vmem [shape: f32[4,1], index: 7, kind: input, shape index: {}]
  %s8 = inlined_call_operand.hbm [shape: f32[2,4,256], index: 8, kind: output, shape index: {}]
  %s9 = sld [smem:[#allocation0]]
  $region65: #{tpu_custom_call.1} parent=0
    _
  %s11 = ssub.s32 1, %s9
  %s12 = scalar_select 0, %s11, %s9
  $region1: #{tpu_custom_call.1} parent=0
    #allocation2 [shape = 'u8[4096]{0}', space=vmem, size = 0x1000, scoped, tag = 'output window, operand 0']
    #allocation3 [shape = 's32[2]{0}', space=sflag, size = 0x8, scoped, tag = 'scoped memory for tpu_custom_call.1']
    %13 = vsyncpa [#allocation3], 0
    %s14 = scalar_lea.sflag [#allocation3], 1
    %15 = vsyncpa %s14, 0
    loop: start=0, step=1, limit=6
    $region2: #{tpu_custom_call.1} parent=1 // loop_pre_header
      _
    $region3: #{tpu_custom_call.1} parent=1 // loop_header
      %s17 = sphi 0, %s21
      %p18 = scmp.ge.s32.totalorder %s17, 6
      %s24 = sphi 0, %s36
      %s25 = sphi 0, %s32
      %s26 = sphi 0, %s24
      %s27 = sphi 0, %s25
      %s28 = sphi 0, %s26
      %s29 = sphi 0, %s27
      %s39 = sphi 0, %s41
      %s42 = sphi 0, %s39
      %s43 = sphi 0, %s42
      %s59 = sphi 0, %s43
      %s63 = sphi 0, %s63
      %s65 = sphi 0, %s63
      %s66 = sphi 0, %s65
      %s80 = sphi 0, %s66
      %s84 = sphi 0, %s84
      %s86 = sphi 0, %s84
      %s87 = sphi 0, %s86
      %s101 = sphi 0, %s87
      %s105 = sphi 0, %s105
      %s107 = sphi 0, %s105
      %s108 = sphi 0, %s107
      %s122 = sphi 0, %s108
      %s126 = sphi 0, %s126
      %s128 = sphi 0, %s126
      %s129 = sphi 0, %s128
      %s143 = sphi 0, %s129
      %s147 = sphi 0, %s147
      %s149 = sphi 0, %s147
      %s150 = sphi 0, %s149
      %s164 = sphi 0, %s150
      %s168 = sphi 0, %s168
      %s170 = sphi 0, %s168
      %s171 = sphi 0, %s170
      %s185 = sphi 0, %s171
      %s189 = sphi 0, %s189
      %s191 = sphi 0, %s189
      %s192 = sphi 0, %s191
      %s206 = sphi 0, %s192
      %s214 = sphi 0, %s216
      %s217 = sphi 0, %s214
      %s218 = sphi 0, %s217
      %s234 = sphi 0, %s218
    $region4: #{tpu_custom_call.1} parent=1 // loop_header_branch
      %20 = sbr.rel (%p18) target = $region8
    $region5: #{tpu_custom_call.1} parent=1 // loop_body
      %s22 = ssub.s32 %s17, 1
      %s23 = ssub.s32 %s17, 2
      %s30 = sadd.s32 1, %s25
      %p31 = scmp.ge.s32.totalorder %s30, 2
      %s32 = scalar_select %p31, 0, %s30
      %s33 = sadd.s32 1, %s24
      %s34 = scalar_select %p31, %s33, %s24
      %p35 = scmp.ge.s32.totalorder %s34, 2
      %s36 = scalar_select %p35, 0, %s34
      %s37 = ssub.s32 %s24, %s36
      %p38 = scmp.eq.s32.totalorder %s37, 0
      %s40 = sadd.s32 %s39, 1
      %s41 = scalar_select %p38, %s39, %s40
      %p44 = pneg %p38
      %p45 = scmp.eq.s32.totalorder %s17, 3
      %p46 = por %p44, %p45
      %p47 = scmp.ne.s32.totalorder %s39, %s42
      %p48 = scmp.eq.s32.totalorder %s17, 0
      %p49 = por %p47, %p48
      %p50 = scmp.ne.s32.totalorder %s39, %s42
      %p51 = scmp.eq.s32.totalorder %s22, 3
      %p52 = por %p50, %p51
      %p53 = scmp.ne.s32.totalorder %s42, %s43
      %p54 = scmp.eq.s32.totalorder %s22, 0
      %p55 = por %p53, %p54
      %p56 = scmp.ne.s32.totalorder %s42, %s43
      %p57 = scmp.eq.s32.totalorder %s23, 3
      %p58 = por %p56, %p57
      %p60 = scmp.ne.s32.totalorder %s43, %s59
      %p61 = scmp.eq.s32.totalorder %s23, 0
      %p62 = por %p60, %p61
      %s64 = sadd.s32 %s63, 1
      %p67 = scmp.eq.s32.totalorder %s17, 3
      %p68 = scmp.ne.s32.totalorder %s63, %s65
      %p69 = scmp.eq.s32.totalorder %s17, 0
      %p70 = por %p68, %p69
      %p71 = scmp.ne.s32.totalorder %s63, %s65
      %p72 = scmp.eq.s32.totalorder %s22, 3
      %p73 = por %p71, %p72
      %p74 = scmp.ne.s32.totalorder %s65, %s66
      %p75 = scmp.eq.s32.totalorder %s22, 0
      %p76 = por %p74, %p75
      %p77 = scmp.ne.s32.totalorder %s65, %s66
      %p78 = scmp.eq.s32.totalorder %s23, 3
      %p79 = por %p77, %p78
      %p81 = scmp.ne.s32.totalorder %s66, %s80
      %p82 = scmp.eq.s32.totalorder %s23, 0
      %p83 = por %p81, %p82
      %s85 = sadd.s32 %s84, 1
      %p88 = scmp.eq.s32.totalorder %s17, 3
      %p89 = scmp.ne.s32.totalorder %s84, %s86
      %p90 = scmp.eq.s32.totalorder %s17, 0
      %p91 = por %p89, %p90
      %p92 = scmp.ne.s32.totalorder %s84, %s86
      %p93 = scmp.eq.s32.totalorder %s22, 3
      %p94 = por %p92, %p93
      %p95 = scmp.ne.s32.totalorder %s86, %s87
      %p96 = scmp.eq.s32.totalorder %s22, 0
      %p97 = por %p95, %p96
      %p98 = scmp.ne.s32.totalorder %s86, %s87
      %p99 = scmp.eq.s32.totalorder %s23, 3
      %p100 = por %p98, %p99
      %p102 = scmp.ne.s32.totalorder %s87, %s101
      %p103 = scmp.eq.s32.totalorder %s23, 0
      %p104 = por %p102, %p103
      %s106 = sadd.s32 %s105, 1
      %p109 = scmp.eq.s32.totalorder %s17, 3
      %p110 = scmp.ne.s32.totalorder %s105, %s107
      %p111 = scmp.eq.s32.totalorder %s17, 0
      %p112 = por %p110, %p111
      %p113 = scmp.ne.s32.totalorder %s105, %s107
      %p114 = scmp.eq.s32.totalorder %s22, 3
      %p115 = por %p113, %p114
      %p116 = scmp.ne.s32.totalorder %s107, %s108
      %p117 = scmp.eq.s32.totalorder %s22, 0
      %p118 = por %p116, %p117
      %p119 = scmp.ne.s32.totalorder %s107, %s108
      %p120 = scmp.eq.s32.totalorder %s23, 3
      %p121 = por %p119, %p120
      %p123 = scmp.ne.s32.totalorder %s108, %s122
      %p124 = scmp.eq.s32.totalorder %s23, 0
      %p125 = por %p123, %p124
      %s127 = sadd.s32 %s126, 1
      %p130 = scmp.eq.s32.totalorder %s17, 3
      %p131 = scmp.ne.s32.totalorder %s126, %s128
      %p132 = scmp.eq.s32.totalorder %s17, 0
      %p133 = por %p131, %p132
      %p134 = scmp.ne.s32.totalorder %s126, %s128
      %p135 = scmp.eq.s32.totalorder %s22, 3
      %p136 = por %p134, %p135
      %p137 = scmp.ne.s32.totalorder %s128, %s129
      %p138 = scmp.eq.s32.totalorder %s22, 0
      %p139 = por %p137, %p138
      %p140 = scmp.ne.s32.totalorder %s128, %s129
      %p141 = scmp.eq.s32.totalorder %s23, 3
      %p142 = por %p140, %p141
      %p144 = scmp.ne.s32.totalorder %s129, %s143
      %p145 = scmp.eq.s32.totalorder %s23, 0
      %p146 = por %p144, %p145
      %s148 = sadd.s32 %s147, 1
      %p151 = scmp.eq.s32.totalorder %s17, 3
      %p152 = scmp.ne.s32.totalorder %s147, %s149
      %p153 = scmp.eq.s32.totalorder %s17, 0
      %p154 = por %p152, %p153
      %p155 = scmp.ne.s32.totalorder %s147, %s149
      %p156 = scmp.eq.s32.totalorder %s22, 3
      %p157 = por %p155, %p156
      %p158 = scmp.ne.s32.totalorder %s149, %s150
      %p159 = scmp.eq.s32.totalorder %s22, 0
      %p160 = por %p158, %p159
      %p161 = scmp.ne.s32.totalorder %s149, %s150
      %p162 = scmp.eq.s32.totalorder %s23, 3
      %p163 = por %p161, %p162
      %p165 = scmp.ne.s32.totalorder %s150, %s164
      %p166 = scmp.eq.s32.totalorder %s23, 0
      %p167 = por %p165, %p166
      %s169 = sadd.s32 %s168, 1
      %p172 = scmp.eq.s32.totalorder %s17, 3
      %p173 = scmp.ne.s32.totalorder %s168, %s170
      %p174 = scmp.eq.s32.totalorder %s17, 0
      %p175 = por %p173, %p174
      %p176 = scmp.ne.s32.totalorder %s168, %s170
      %p177 = scmp.eq.s32.totalorder %s22, 3
      %p178 = por %p176, %p177
      %p179 = scmp.ne.s32.totalorder %s170, %s171
      %p180 = scmp.eq.s32.totalorder %s22, 0
      %p181 = por %p179, %p180
      %p182 = scmp.ne.s32.totalorder %s170, %s171
      %p183 = scmp.eq.s32.totalorder %s23, 3
      %p184 = por %p182, %p183
      %p186 = scmp.ne.s32.totalorder %s171, %s185
      %p187 = scmp.eq.s32.totalorder %s23, 0
      %p188 = por %p186, %p187
      %s190 = sadd.s32 %s189, 1
      %p193 = scmp.eq.s32.totalorder %s17, 3
      %p194 = scmp.ne.s32.totalorder %s189, %s191
      %p195 = scmp.eq.s32.totalorder %s17, 0
      %p196 = por %p194, %p195
      %p197 = scmp.ne.s32.totalorder %s189, %s191
      %p198 = scmp.eq.s32.totalorder %s22, 3
      %p199 = por %p197, %p198
      %p200 = scmp.ne.s32.totalorder %s191, %s192
      %p201 = scmp.eq.s32.totalorder %s22, 0
      %p202 = por %p200, %p201
      %p203 = scmp.ne.s32.totalorder %s191, %s192
      %p204 = scmp.eq.s32.totalorder %s23, 3
      %p205 = por %p203, %p204
      %p207 = scmp.ne.s32.totalorder %s192, %s206
      %p208 = scmp.eq.s32.totalorder %s23, 0
      %p209 = por %p207, %p208
      %s210 = ssub.s32 %s24, %s36
      %s211 = ssub.s32 %s25, %s32
      %s212 = sor.u32 %s210, %s211
      %p213 = scmp.eq.s32.totalorder %s212, 0
      %s215 = sadd.s32 %s214, 1
      %s216 = scalar_select %p213, %s214, %s215
      %p219 = pneg %p213
      %p220 = scmp.eq.s32.totalorder %s17, 3
      %p221 = por %p219, %p220
      %p222 = scmp.ne.s32.totalorder %s214, %s217
      %p223 = scmp.eq.s32.totalorder %s17, 0
      %p224 = por %p222, %p223
      %p225 = scmp.ne.s32.totalorder %s214, %s217
      %p226 = scmp.eq.s32.totalorder %s22, 3
      %p227 = por %p225, %p226
      %p228 = scmp.ne.s32.totalorder %s217, %s218
      %p229 = scmp.eq.s32.totalorder %s22, 0
      %p230 = por %p228, %p229
      %p231 = scmp.ne.s32.totalorder %s217, %s218
      %p232 = scmp.eq.s32.totalorder %s23, 3
      %p233 = por %p231, %p232
      %p235 = scmp.ne.s32.totalorder %s218, %s234
      %p236 = scmp.eq.s32.totalorder %s23, 0
      %p237 = por %p235, %p236
      %p238 = scmp.le.s32.totalorder 1, %s17
      %p239 = scmp.lt.s32.totalorder %s17, 5
      %p240 = pnand %p238, %p239
      %p241 = pneg %p240
      // Predicated region
      $region9: #{tpu_custom_call.1} parent=5 // pred_check
        _
      $region10: #{tpu_custom_call.1} parent=5 // pred_check_branch
        %243 = sbr.rel (%p240) target = $region12
      $region11: #{tpu_custom_call.1} parent=5 // pred_region
        %s244 = ssub.s32 %s17, 1
        // Predicated region
        $region13: #{tpu_custom_call.1} parent=11 // pred_check
          %p245 = pneg %p76
        $region14: #{tpu_custom_call.1} parent=11 // pred_check_branch
          %247 = sbr.rel (%p245) target = $region16
        $region15: #{tpu_custom_call.1} parent=11 // pred_region
          _
        $region16: #{tpu_custom_call.1} parent=11 // pred_fallthru
          _
        // Predicated region
        $region17: #{tpu_custom_call.1} parent=11 // pred_check
          %p248 = pneg %p97
        $region18: #{tpu_custom_call.1} parent=11 // pred_check_branch
          %250 = sbr.rel (%p248) target = $region20
        $region19: #{tpu_custom_call.1} parent=11 // pred_region
          _
        $region20: #{tpu_custom_call.1} parent=11 // pred_fallthru
          _
        // Predicated region
        $region21: #{tpu_custom_call.1} parent=11 // pred_check
          %p251 = pneg %p118
        $region22: #{tpu_custom_call.1} parent=11 // pred_check_branch
          %253 = sbr.rel (%p251) target = $region24
        $region23: #{tpu_custom_call.1} parent=11 // pred_region
          _
        $region24: #{tpu_custom_call.1} parent=11 // pred_fallthru
          _
        // Predicated region
        $region25: #{tpu_custom_call.1} parent=11 // pred_check
          %p254 = pneg %p139
        $region26: #{tpu_custom_call.1} parent=11 // pred_check_branch
          %256 = sbr.rel (%p254) target = $region28
        $region27: #{tpu_custom_call.1} parent=11 // pred_region
          _
        $region28: #{tpu_custom_call.1} parent=11 // pred_fallthru
          _
        // Predicated region
        $region29: #{tpu_custom_call.1} parent=11 // pred_check
          %p257 = pneg %p160
        $region30: #{tpu_custom_call.1} parent=11 // pred_check_branch
          %259 = sbr.rel (%p257) target = $region32
        $region31: #{tpu_custom_call.1} parent=11 // pred_region
          _
        $region32: #{tpu_custom_call.1} parent=11 // pred_fallthru
          _
        // Predicated region
        $region33: #{tpu_custom_call.1} parent=11 // pred_check
          %p260 = pneg %p181
        $region34: #{tpu_custom_call.1} parent=11 // pred_check_branch
          %262 = sbr.rel (%p260) target = $region36
        $region35: #{tpu_custom_call.1} parent=11 // pred_region
          _
        $region36: #{tpu_custom_call.1} parent=11 // pred_fallthru
          _
        // Predicated region
        $region37: #{tpu_custom_call.1} parent=11 // pred_check
          %p263 = pneg %p202
        $region38: #{tpu_custom_call.1} parent=11 // pred_check_branch
          %265 = sbr.rel (%p263) target = $region40
        $region39: #{tpu_custom_call.1} parent=11 // pred_region
          _
        $region40: #{tpu_custom_call.1} parent=11 // pred_fallthru
          _
      $region12: #{tpu_custom_call.1} parent=5 // pred_fallthru
        _
      %p266 = scmp.lt.s32.totalorder %s17, 4
      // Predicated region
      $region41: #{tpu_custom_call.1} parent=5 // pred_check
        %p267 = pneg %p266
      $region42: #{tpu_custom_call.1} parent=5 // pred_check_branch
        %269 = sbr.rel (%p267) target = $region44
      $region43: #{tpu_custom_call.1} parent=5 // pred_region
        // Predicated region
        $region45: #{tpu_custom_call.1} parent=43 // pred_check
          %p270 = pneg %p49
        $region46: #{tpu_custom_call.1} parent=43 // pred_check_branch
          %272 = sbr.rel (%p270) target = $region48
        $region47: #{tpu_custom_call.1} parent=43 // pred_region
          %p273 = scmp.lt.s32.totalorder %s24, 1
          %s274 = scalar_select %p273, %s24, 1
          %s275 = smul.addr %s274, 3
          %s276 = smul.addr %s275, 4
          %s277 = scalar_lea.vmem %s0, %s276
        $region48: #{tpu_custom_call.1} parent=43 // pred_fallthru
          _
      $region44: #{tpu_custom_call.1} parent=5 // pred_fallthru
        _
      %p278 = scmp.le.s32.totalorder 1, %s17
      %p279 = scmp.lt.s32.totalorder %s17, 5
      %p280 = pnand %p278, %p279
      %p281 = pneg %p280
      // Predicated region
      $region49: #{tpu_custom_call.1} parent=5 // pred_check
        _
      $region50: #{tpu_custom_call.1} parent=5 // pred_check_branch
        %283 = sbr.rel (%p280) target = $region52
      $region51: #{tpu_custom_call.1} parent=5 // pred_region
        %s284 = ssub.s32 %s17, 1
        %p285 = scmp.lt.s32.totalorder %s26, 1
        %s286 = scalar_select %p285, %s26, 1
        %s287 = smul.addr %s286, 3
        %s288 = smul.addr %s287, 4
        %s289 = scalar_lea.vmem %s0, %s288
        %p290 = pneg %p55
        %p291 = pneg %p52
        %p292 = pneg %p76
        %p293 = pneg %p73
        %p294 = pneg %p97
        %p295 = pneg %p94
        %p296 = pneg %p118
        %p297 = pneg %p115
        %p298 = pneg %p139
        %p299 = pneg %p136
        %p300 = pneg %p160
        %p301 = pneg %p157
        %p302 = pneg %p181
        %p303 = pneg %p178
        %p304 = pneg %p202
        %p305 = pneg %p199
        %p306 = pneg %p230
        %p307 = pneg %p227
        %s308 = sand.u32 %s217, 1
        %s309 = scalar_lea.sflag [#allocation3], %s308
        %s310 = sand.u32 %s217, 1
        %s311 = smul.addr %s310, 4
        %s312 = scalar_lea.vmem [#allocation2], %s311
        %p313 = scmp.lt.s32.totalorder %s26, 1
        %s314 = scalar_select %p313, %s26, 1
        %s315 = smul.addr %s314, 3
        %s316 = smul.addr %s315, 4
        %s317 = scalar_lea.vmem %s0, %s316
        %s319 = smul.u32 %s27, 128
        %s320 = sshra.s32 %s319, 7
        %s321 = sand.u32 %s319, 127
        %s322 = smul.addr %s320, 4
        %s323 = scalar_lea.vmem %s317, %s322
        %v324 = vld [vmem:[%s323] sm:$0xff]
        %v325 = vld [vmem:[%s2] sm:$0xf]
        %v326 = vld [vmem:[%s2 + $0x4] sm:$0xf]
        %v328 = vcombine.high %v324, %v324
        %v330 = vpack.c.bf16 %v324, %v324
        %v331 = vpack.c.bf16 %v328, %v328
        %v332 = vld [vmem:[%s3] sm:$0xff]
        %v333 = vld [vmem:[%s3 + $0x8] sm:$0xff]
        %335 = vset.pattern.permute.xlu0 0
        %336 = vperm.xlu0 %335, %v332
        %v337 = vpop.permute.xlu0 %336
        %340 = vset.pattern.permute.xlu0 0
        %341 = vperm.xlu0 %340, %v333
        %v342 = vpop.permute.xlu0 %341
        %v346 = vunpack.c.l.b16 %v325
        %v347 = vunpack.c.l.b16 %v326
        %v348 = vpack.c.b16 %v347, %v346
        %vm349 = vcmask 31744
        %v351 = vsel %vm349, %v348, 0
        %vm353 = vcmask 1041408
        %v355 = vsel %vm353, %v330, 0
        %v358 = vsel %vm353, %v331, 0
        %360 = vmatprep.subr.bf16.mxu0 0
        %361 = vmatpush1.bf16.msra.mxu0 0
        %362 = vmatprep.subr.bf16.mxu0 0
        %363 = vmatpush1.bf16.msra.mxu0 0
        %364 = vmatprep.subr.bf16.mxu0 0
        %365 = vmatpush1.bf16.msra.mxu0 0
        %366 = vmatprep.subr.bf16.mxu0 0
        %367 = vmatpush1.bf16.msra.mxu0 0
        %368 = vmatprep.subr.bf16.mxu0 0
        %369 = vmatpush1.bf16.msra.mxu0 0
        %370 = vmatprep.subr.bf16.mxu0 0
        %371 = vmatpush1.bf16.msra.mxu0 0
        %372 = vmatprep.subr.bf16.mxu0 0
        %373 = vmatpush1.bf16.msra.mxu0 0
        %374 = vmatprep.subr.bf16.mxu0 %v358
        %375 = vmatpush1.bf16.msra.mxu0 %v355
        %376 = vmatprep.subr.bf16.mxu0 0
        %377 = vmatpush2.bf16.msra.mxu0 0
        %378 = vmatprep.subr.bf16.mxu0 0
        %379 = vmatpush2.bf16.msra.mxu0 0
        %380 = vmatprep.subr.bf16.mxu0 0
        %381 = vmatpush2.bf16.msra.mxu0 0
        %382 = vmatprep.subr.bf16.mxu0 0
        %383 = vmatpush2.bf16.msra.mxu0 0
        %384 = vmatprep.subr.bf16.mxu0 0
        %385 = vmatpush2.bf16.msra.mxu0 0
        %386 = vmatprep.subr.bf16.mxu0 0
        %387 = vmatpush2.bf16.msra.mxu0 0
        %388 = vmatprep.subr.bf16.mxu0 0
        %389 = vmatpush2.bf16.msra.mxu0 0
        %390 = vmatprep.subr.bf16.mxu0 0
        %391 = vmatpush2.bf16.msra.mxu0 0
        %392 = vmatprep.mubr.bf16.mxu0 0
        %393 = vmatmul.mubr.bf16.gmra.mxu0 %v351
        %v394 = vpop.f32.mrf.mxu0
        %v395 = vadd.f32 %v337, %v394
        %v396 = vpop.f32.mrf.mxu0
        %v397 = vadd.f32 %v337, %v396
        %v398 = vpop.f32.mrf.mxu0
        %v399 = vadd.f32 %v342, %v398
        %v400 = vpop.f32.mrf.mxu0
        %v401 = vadd.f32 %v342, %v400
        %402 = vdwg.mxu0
        %p403 = scmp.eq.s32.totalorder %s27, 0
        %s404 = scalar_select %p403, 1.0, 0.0
        %p405 = scmp.eq.s32.totalorder %s27, 1
        %s406 = scalar_select %p405, 1.0, 0.0
        %s407 = scalar_lea.vmem %s1, 2
        %v408 = vld [vmem:[%s407] ss:$4 sm:$0x3]
        %v409 = vstv %s404
        %v410 = vmul.f32 %v408, %v409
        %s411 = scalar_lea.vmem %s1, 3
        %v412 = vld [vmem:[%s411] ss:$4 sm:$0x3]
        %v413 = vstv %s406
        %v414 = vmul.f32 %v412, %v413
        %v415 = vadd.f32 %v410, %v414
        %v416 = vsub.f32 1.0, %v415
        %v418 = vlaneseq
        %v419 = vshrl.u32 %v418, 7
        %v420 = vsub.s32 0, %v419
        %v421 = vrot.slane %v416, %v420
        %v422 = vlaneseq
        %v423 = vshrl.u32 %v422, 7
        %v424 = vsub.s32 1, %v423
        %v425 = vrot.slane %v416, %v424
        %v428 = vmul.f32 %v395, %v421
        %v429 = vmul.f32 %v397, %v425
        %v430 = vmul.f32 %v399, %v421
        %v431 = vmul.f32 %v401, %v425
        %v432 = vld [vmem:[%s1] ss:$4 sm:$0x3]
        %v434 = vlaneseq
        %v435 = vshrl.u32 %v434, 7
        %v436 = vsub.s32 0, %v435
        %v437 = vrot.slane %v432, %v436
        %v438 = vlaneseq
        %v439 = vshrl.u32 %v438, 7
        %v440 = vsub.s32 1, %v439
        %v441 = vrot.slane %v432, %v440
        %v444 = vmul.f32 %v428, %v437
        %v445 = vmul.f32 %v429, %v441
        %v446 = vmul.f32 %v430, %v437
        %v447 = vmul.f32 %v431, %v441
        %s448 = scalar_lea.vmem %s1, 1
        %v449 = vld [vmem:[%s448] ss:$4 sm:$0x3]
        %v451 = vlaneseq
        %v452 = vshrl.u32 %v451, 7
        %v453 = vsub.s32 0, %v452
        %v454 = vrot.slane %v449, %v453
        %v455 = vlaneseq
        %v456 = vshrl.u32 %v455, 7
        %v457 = vsub.s32 1, %v456
        %v458 = vrot.slane %v449, %v457
        %v461 = vmul.f32 %v428, %v454
        %v462 = vmul.f32 %v429, %v458
        %v463 = vmul.f32 %v430, %v454
        %v464 = vmul.f32 %v431, %v458
        %v465 = vld [vmem:[%s4] sm:$0xff]
        %v466 = vld [vmem:[%s4 + $0x8] sm:$0xff]
        %468 = vset.pattern.permute.xlu0 4
        %469 = vperm.xlu0 %468, %v465
        %v470 = vpop.permute.xlu0 %469
        %473 = vset.pattern.permute.xlu0 4
        %474 = vperm.xlu0 %473, %v466
        %v475 = vpop.permute.xlu0 %474
        %v477 = vmul.f32 %v428, %v470
        %v478 = vmul.f32 %v429, %v470
        %v479 = vmul.f32 %v430, %v475
        %v480 = vmul.f32 %v431, %v475
        %v481 = vld [vmem:[%s5] sm:$0xff]
        %v482 = vld [vmem:[%s5 + $0x8] sm:$0xff]
        %484 = vset.pattern.permute.xlu0 0
        %485 = vperm.xlu0 %484, %v481
        %v486 = vpop.permute.xlu0 %485
        %489 = vset.pattern.permute.xlu0 0
        %490 = vperm.xlu0 %489, %v482
        %v491 = vpop.permute.xlu0 %490
        %v493 = vadd.f32 %v477, %v486
        %v494 = vadd.f32 %v478, %v486
        %v495 = vadd.f32 %v479, %v491
        %v496 = vadd.f32 %v480, %v491
        %497 = vrot.lane.b32.xlu0 %v444, 17
        %v498 = vpop.permute.xlu0 %497
        %499 = vrot.lane.b32.xlu0 %v446, 17
        %v500 = vpop.permute.xlu0 %499
        %501 = vrot.lane.b32.xlu0 %v445, 17
        %v502 = vpop.permute.xlu0 %501
        %503 = vrot.lane.b32.xlu0 %v447, 17
        %v504 = vpop.permute.xlu0 %503
        %v505 = vlaneseq
        %v506 = vand.u32 %v505, 127
        %vm507 = vcmp.lt.s32.totalorder %v506, 17
        %v508 = vsel %vm507, %v498, %v502
        %v509 = vsel %vm507, %v500, %v504
        %v510 = vsel %vm507, %v502, %v498
        %v511 = vsel %vm507, %v504, %v500
        %512 = vset.pattern.permute.xlu0 0
        %513 = vperm.xlu0 %512, %v465
        %v514 = vpop.permute.xlu0 %513
        %516 = vset.pattern.permute.xlu0 0
        %517 = vperm.xlu0 %516, %v466
        %v518 = vpop.permute.xlu0 %517
        %v520 = vmul.f32 %v510, %v514
        %v521 = vmul.f32 %v508, %v514
        %v522 = vmul.f32 %v511, %v518
        %v523 = vmul.f32 %v509, %v518
        %v524 = vadd.f32 %v493, %v520
        %v525 = vadd.f32 %v494, %v521
        %v526 = vadd.f32 %v495, %v522
        %v527 = vadd.f32 %v496, %v523
        %528 = vrot.lane.b32.xlu0 %v428, 16
        %v529 = vpop.permute.xlu0 %528
        %530 = vrot.lane.b32.xlu0 %v430, 16
        %v531 = vpop.permute.xlu0 %530
        %532 = vrot.lane.b32.xlu0 %v429, 16
        %v533 = vpop.permute.xlu0 %532
        %534 = vrot.lane.b32.xlu0 %v431, 16
        %v535 = vpop.permute.xlu0 %534
        %vm536 = vcmp.lt.s32.totalorder %v506, 16
        %v537 = vsel %vm536, %v529, %v533
        %v538 = vsel %vm536, %v531, %v535
        %v539 = vsel %vm536, %v533, %v529
        %v540 = vsel %vm536, %v535, %v531
        %541 = vset.pattern.permute.xlu0 1
        %542 = vperm.xlu0 %541, %v465
        %v543 = vpop.permute.xlu0 %542
        %545 = vset.pattern.permute.xlu0 1
        %546 = vperm.xlu0 %545, %v466
        %v547 = vpop.permute.xlu0 %546
        %v549 = vmul.f32 %v539, %v543
        %v550 = vmul.f32 %v537, %v543
        %v551 = vmul.f32 %v540, %v547
        %v552 = vmul.f32 %v538, %v547
        %v553 = vadd.f32 %v524, %v549
        %v554 = vadd.f32 %v525, %v550
        %v555 = vadd.f32 %v526, %v551
        %v556 = vadd.f32 %v527, %v552
        %557 = vrot.lane.b32.xlu0 %v461, 15
        %v558 = vpop.permute.xlu0 %557
        %559 = vrot.lane.b32.xlu0 %v463, 15
        %v560 = vpop.permute.xlu0 %559
        %561 = vrot.lane.b32.xlu0 %v462, 15
        %v562 = vpop.permute.xlu0 %561
        %563 = vrot.lane.b32.xlu0 %v464, 15
        %v564 = vpop.permute.xlu0 %563
        %vm565 = vcmp.lt.s32.totalorder %v506, 15
        %v566 = vsel %vm565, %v558, %v562
        %v567 = vsel %vm565, %v560, %v564
        %v568 = vsel %vm565, %v562, %v558
        %v569 = vsel %vm565, %v564, %v560
        %570 = vset.pattern.permute.xlu0 2
        %571 = vperm.xlu0 %570, %v465
        %v572 = vpop.permute.xlu0 %571
        %574 = vset.pattern.permute.xlu0 2
        %575 = vperm.xlu0 %574, %v466
        %v576 = vpop.permute.xlu0 %575
        %v578 = vmul.f32 %v568, %v572
        %v579 = vmul.f32 %v566, %v572
        %v580 = vmul.f32 %v569, %v576
        %v581 = vmul.f32 %v567, %v576
        %v582 = vadd.f32 %v553, %v578
        %v583 = vadd.f32 %v554, %v579
        %v584 = vadd.f32 %v555, %v580
        %v585 = vadd.f32 %v556, %v581
        %586 = vrot.lane.b32.xlu0 %v444, 1
        %v587 = vpop.permute.xlu0 %586
        %588 = vrot.lane.b32.xlu0 %v446, 1
        %v589 = vpop.permute.xlu0 %588
        %590 = vrot.lane.b32.xlu0 %v445, 1
        %v591 = vpop.permute.xlu0 %590
        %592 = vrot.lane.b32.xlu0 %v447, 1
        %v593 = vpop.permute.xlu0 %592
        %vm594 = vcmp.lt.s32.totalorder %v506, 1
        %v595 = vsel %vm594, %v587, %v591
        %v596 = vsel %vm594, %v589, %v593
        %v597 = vsel %vm594, %v591, %v587
        %v598 = vsel %vm594, %v593, %v589
        %599 = vset.pattern.permute.xlu0 3
        %600 = vperm.xlu0 %599, %v465
        %v601 = vpop.permute.xlu0 %600
        %603 = vset.pattern.permute.xlu0 3
        %604 = vperm.xlu0 %603, %v466
        %v605 = vpop.permute.xlu0 %604
        %v607 = vmul.f32 %v597, %v601
        %v608 = vmul.f32 %v595, %v601
        %v609 = vmul.f32 %v598, %v605
        %v610 = vmul.f32 %v596, %v605
        %v611 = vadd.f32 %v582, %v607
        %v612 = vadd.f32 %v583, %v608
        %v613 = vadd.f32 %v584, %v609
        %v614 = vadd.f32 %v585, %v610
        %615 = vrot.lane.b32.xlu0 %v461, 127
        %v616 = vpop.permute.xlu0 %615
        %617 = vrot.lane.b32.xlu0 %v463, 127
        %v618 = vpop.permute.xlu0 %617
        %619 = vrot.lane.b32.xlu0 %v462, 127
        %v620 = vpop.permute.xlu0 %619
        %621 = vrot.lane.b32.xlu0 %v464, 127
        %v622 = vpop.permute.xlu0 %621
        %vm623 = vcmp.lt.s32.totalorder %v506, 127
        %v624 = vsel %vm623, %v616, %v620
        %v625 = vsel %vm623, %v618, %v622
        %v626 = vsel %vm623, %v620, %v616
        %v627 = vsel %vm623, %v622, %v618
        %628 = vset.pattern.permute.xlu0 5
        %629 = vperm.xlu0 %628, %v465
        %v630 = vpop.permute.xlu0 %629
        %632 = vset.pattern.permute.xlu0 5
        %633 = vperm.xlu0 %632, %v466
        %v634 = vpop.permute.xlu0 %633
        %v636 = vmul.f32 %v624, %v630
        %v637 = vmul.f32 %v626, %v630
        %v638 = vmul.f32 %v625, %v634
        %v639 = vmul.f32 %v627, %v634
        %v640 = vadd.f32 %v611, %v636
        %v641 = vadd.f32 %v612, %v637
        %v642 = vadd.f32 %v613, %v638
        %v643 = vadd.f32 %v614, %v639
        %644 = vrot.lane.b32.xlu0 %v444, 113
        %v645 = vpop.permute.xlu0 %644
        %646 = vrot.lane.b32.xlu0 %v446, 113
        %v647 = vpop.permute.xlu0 %646
        %648 = vrot.lane.b32.xlu0 %v445, 113
        %v649 = vpop.permute.xlu0 %648
        %650 = vrot.lane.b32.xlu0 %v447, 113
        %v651 = vpop.permute.xlu0 %650
        %vm652 = vcmp.lt.s32.totalorder %v506, 113
        %v653 = vsel %vm652, %v645, %v649
        %v654 = vsel %vm652, %v647, %v651
        %v655 = vsel %vm652, %v649, %v645
        %v656 = vsel %vm652, %v651, %v647
        %657 = vset.pattern.permute.xlu0 6
        %658 = vperm.xlu0 %657, %v465
        %v659 = vpop.permute.xlu0 %658
        %661 = vset.pattern.permute.xlu0 6
        %662 = vperm.xlu0 %661, %v466
        %v663 = vpop.permute.xlu0 %662
        %v665 = vmul.f32 %v653, %v659
        %v666 = vmul.f32 %v655, %v659
        %v667 = vmul.f32 %v654, %v663
        %v668 = vmul.f32 %v656, %v663
        %v669 = vadd.f32 %v640, %v665
        %v670 = vadd.f32 %v641, %v666
        %v671 = vadd.f32 %v642, %v667
        %v672 = vadd.f32 %v643, %v668
        %673 = vrot.lane.b32.xlu0 %v428, 112
        %v674 = vpop.permute.xlu0 %673
        %675 = vrot.lane.b32.xlu0 %v430, 112
        %v676 = vpop.permute.xlu0 %675
        %677 = vrot.lane.b32.xlu0 %v429, 112
        %v678 = vpop.permute.xlu0 %677
        %679 = vrot.lane.b32.xlu0 %v431, 112
        %v680 = vpop.permute.xlu0 %679
        %vm681 = vcmp.lt.s32.totalorder %v506, 112
        %v682 = vsel %vm681, %v674, %v678
        %v683 = vsel %vm681, %v676, %v680
        %v684 = vsel %vm681, %v678, %v674
        %v685 = vsel %vm681, %v680, %v676
        %686 = vset.pattern.permute.xlu0 7
        %687 = vperm.xlu0 %686, %v465
        %v688 = vpop.permute.xlu0 %687
        %690 = vset.pattern.permute.xlu0 7
        %691 = vperm.xlu0 %690, %v466
        %v692 = vpop.permute.xlu0 %691
        %v694 = vmul.f32 %v682, %v688
        %v695 = vmul.f32 %v684, %v688
        %v696 = vmul.f32 %v683, %v692
        %v697 = vmul.f32 %v685, %v692
        %v698 = vadd.f32 %v669, %v694
        %v699 = vadd.f32 %v670, %v695
        %v700 = vadd.f32 %v671, %v696
        %v701 = vadd.f32 %v672, %v697
        %702 = vrot.lane.b32.xlu0 %v461, 111
        %v703 = vpop.permute.xlu0 %702
        %704 = vrot.lane.b32.xlu0 %v463, 111
        %v705 = vpop.permute.xlu0 %704
        %706 = vrot.lane.b32.xlu0 %v462, 111
        %v707 = vpop.permute.xlu0 %706
        %708 = vrot.lane.b32.xlu0 %v464, 111
        %v709 = vpop.permute.xlu0 %708
        %vm710 = vcmp.lt.s32.totalorder %v506, 111
        %v711 = vsel %vm710, %v703, %v707
        %v712 = vsel %vm710, %v705, %v709
        %v713 = vsel %vm710, %v707, %v703
        %v714 = vsel %vm710, %v709, %v705
        %715 = vset.pattern.permute.xlu0 8
        %716 = vperm.xlu0 %715, %v465
        %v717 = vpop.permute.xlu0 %716
        %719 = vset.pattern.permute.xlu0 8
        %720 = vperm.xlu0 %719, %v466
        %v721 = vpop.permute.xlu0 %720
        %v723 = vmul.f32 %v711, %v717
        %v724 = vmul.f32 %v713, %v717
        %v725 = vmul.f32 %v712, %v721
        %v726 = vmul.f32 %v714, %v721
        %v727 = vadd.f32 %v698, %v723
        %v728 = vadd.f32 %v699, %v724
        %v729 = vadd.f32 %v700, %v725
        %v730 = vadd.f32 %v701, %v726
        %v731 = vmul.f32 %v727, 0.5
        %v732 = vmul.f32 %v728, 0.5
        %v733 = vmul.f32 %v727, 0.70710677
        %v734 = vmul.f32 %v728, 0.70710677
        %v735 = vand.u32 2147483647, %v733
        %v736 = vand.u32 2147483647, %v734
        %v737 = vmul.f32 %v735, 0.3275911
        %v738 = vmul.f32 %v736, 0.3275911
        %v739 = vadd.f32 %v737, 1.0
        %v740 = vadd.f32 %v738, 1.0
        %v741 = vrcp.pop %v739
        %v742 = vrcp.pop %v740
        %v743 = vmul.f32 %v741, 1.0614054
        %v744 = vmul.f32 %v742, 1.0614054
        %v745 = vadd.f32 %v743, -1.4531521
        %v746 = vadd.f32 %v744, -1.4531521
        %v747 = vmul.f32 %v745, %v741
        %v748 = vmul.f32 %v746, %v742
        %v749 = vadd.f32 %v747, 1.4214138
        %v750 = vadd.f32 %v748, 1.4214138
        %v751 = vmul.f32 %v749, %v741
        %v752 = vmul.f32 %v750, %v742
        %v753 = vadd.f32 %v751, -0.28449672
        %v754 = vadd.f32 %v752, -0.28449672
        %v755 = vmul.f32 %v753, %v741
        %v756 = vmul.f32 %v754, %v742
        %v757 = vadd.f32 %v755, 0.2548296
        %v758 = vadd.f32 %v756, 0.2548296
        %v759 = vmul.f32 %v757, %v741
        %v760 = vmul.f32 %v758, %v742
        %v761 = vsub.f32 0.0, %v735
        %v762 = vsub.f32 0.0, %v736
        %v763 = vmul.f32 %v761, %v735
        %v764 = vmul.f32 %v762, %v736
        %v765 = vmul.f32 %v763, 1.442695
        %v766 = vpow.pop %v765
        %v767 = vmul.f32 %v764, 1.442695
        %v768 = vpow.pop %v767
        %v769 = vmul.f32 %v759, %v766
        %v770 = vmul.f32 %v760, %v768
        %v771 = vsub.f32 1.0, %v769
        %v772 = vsub.f32 1.0, %v770
        %vm773 = vcmp.ge.f32.partialorder %v733, 0.0
        %vm774 = vcmp.ge.f32.partialorder %v734, 0.0
        %v775 = vsub.f32 0.0, %v771
        %v776 = vsub.f32 0.0, %v772
        %v777 = vsel %vm773, %v771, %v775
        %v778 = vsel %vm774, %v772, %v776
        %v779 = vadd.f32 %v777, 1.0
        %v780 = vadd.f32 %v778, 1.0
        %v781 = vmul.f32 %v731, %v779
        %v782 = vmul.f32 %v732, %v780
        %v783 = vmul.f32 %v781, %v729
        %v784 = vmul.f32 %v782, %v730
        %v785 = vld [vmem:[%s6] sm:$0x3]
        %v786 = vpack.c.bf16 %v783, %v783
        %v787 = vpack.c.bf16 %v784, %v784
        %v788 = vld [vmem:[%s7] sm:$0xf]
        %790 = vset.pattern.permute.xlu0 0
        %791 = vperm.xlu0 %790, %v788
        %v792 = vpop.permute.xlu0 %791
        %796 = vrot.lane.b32.xlu0 %v786, 112
        %v797 = vpop.permute.xlu0 %796
        %798 = vrot.lane.b32.xlu0 %v787, 112
        %v799 = vpop.permute.xlu0 %798
        %vm800 = vcmask 916480
        %v801 = vsel %vm800, %v797, %v799
        %vm802 = vcmask 64512
        %v804 = vsel %vm802, %v785, 0
        %vm806 = vcmask 1043456
        %v808 = vsel %vm806, %v801, 0
        %810 = vmatprep.subr.bf16.mxu0 0
        %811 = vmatpush1.bf16.msra.mxu0 0
        %812 = vmatprep.subr.bf16.mxu0 0
        %813 = vmatpush1.bf16.msra.mxu0 0
        %814 = vmatprep.subr.bf16.mxu0 0
        %815 = vmatpush1.bf16.msra.mxu0 0
        %816 = vmatprep.subr.bf16.mxu0 0
        %817 = vmatpush1.bf16.msra.mxu0 0
        %818 = vmatprep.subr.bf16.mxu0 0
        %819 = vmatpush1.bf16.msra.mxu0 0
        %820 = vmatprep.subr.bf16.mxu0 0
        %821 = vmatpush1.bf16.msra.mxu0 0
        %822 = vmatprep.subr.bf16.mxu0 0
        %823 = vmatpush1.bf16.msra.mxu0 0
        %824 = vmatprep.subr.bf16.mxu0 0
        %825 = vmatpush1.bf16.msra.mxu0 %v808
        %826 = vmatprep.subr.bf16.mxu0 0
        %827 = vmatpush2.bf16.msra.mxu0 0
        %828 = vmatprep.subr.bf16.mxu0 0
        %829 = vmatpush2.bf16.msra.mxu0 0
        %830 = vmatprep.subr.bf16.mxu0 0
        %831 = vmatpush2.bf16.msra.mxu0 0
        %832 = vmatprep.subr.bf16.mxu0 0
        %833 = vmatpush2.bf16.msra.mxu0 0
        %834 = vmatprep.subr.bf16.mxu0 0
        %835 = vmatpush2.bf16.msra.mxu0 0
        %836 = vmatprep.subr.bf16.mxu0 0
        %837 = vmatpush2.bf16.msra.mxu0 0
        %838 = vmatprep.subr.bf16.mxu0 0
        %839 = vmatpush2.bf16.msra.mxu0 0
        %840 = vmatprep.subr.bf16.mxu0 0
        %841 = vmatpush2.bf16.msra.mxu0 0
        %842 = vmatprep.mubr.bf16.mxu0 0
        %843 = vmatmul.mubr.bf16.gmra.mxu0 %v804
        %v844 = vpop.f32.mrf.mxu0
        %v845 = vadd.f32 %v792, %v844
        %v846 = vpop.f32.mrf.mxu0
        %v847 = vpop.f32.mrf.mxu0
        %v848 = vpop.f32.mrf.mxu0
        %849 = vdwg.mxu0
        %850 = vst [vmem:[%s312] sm:$0xf] %v845
        %s851 = sand.u32 %s217, 1
        %s852 = scalar_lea.sflag [#allocation3], %s851
        %s853 = sand.u32 %s217, 1
        %s854 = smul.addr %s853, 4
        %s855 = scalar_lea.vmem [#allocation2], %s854
        // Predicated region
        $region53: #{tpu_custom_call.1} parent=51 // pred_check
          %p856 = pneg %p227
        $region54: #{tpu_custom_call.1} parent=51 // pred_check_branch
          %858 = sbr.rel (%p856) target = $region56
        $region55: #{tpu_custom_call.1} parent=51 // pred_region
          %s860 = ssub.s32 64, 64
          %861 = vsyncadd %s852, %s860
          %s862 = smul.addr %s26, 2
          %s863 = sadd.s32 %s27, %s862
          %s864 = smul.addr %s863, 64
          %s865 = scalar_lea.hbm %s8, %s864
          %s867 = sshll.u32 %s855, 4
          %s868 = int_to_ptr.vmem [resolvable:$true] %s867
          %870 = dma.vmem_to_hbm [thread:$0]  %s868, 64, %s865, %s852
        $region56: #{tpu_custom_call.1} parent=51 // pred_fallthru
          _
      $region52: #{tpu_custom_call.1} parent=5 // pred_fallthru
        _
      %p871 = scmp.le.s32.totalorder 2, %s17
      // Predicated region
      $region57: #{tpu_custom_call.1} parent=5 // pred_check
        %p872 = pneg %p871
      $region58: #{tpu_custom_call.1} parent=5 // pred_check_branch
        %874 = sbr.rel (%p872) target = $region60
      $region59: #{tpu_custom_call.1} parent=5 // pred_region
        %s875 = ssub.s32 %s17, 2
        // Predicated region
        $region61: #{tpu_custom_call.1} parent=59 // pred_check
          %p876 = pneg %p233
        $region62: #{tpu_custom_call.1} parent=59 // pred_check_branch
          %878 = sbr.rel (%p876) target = $region64
        $region63: #{tpu_custom_call.1} parent=59 // pred_region
          %s879 = sand.u32 %s218, 1
          %s880 = scalar_lea.sflag [#allocation3], %s879
          %s881 = sand.u32 %s218, 1
          %s882 = smul.addr %s881, 4
          %s883 = scalar_lea.vmem [#allocation2], %s882
          %884 = dma.done %s880, 64
        $region64: #{tpu_custom_call.1} parent=59 // pred_fallthru
          _
      $region60: #{tpu_custom_call.1} parent=5 // pred_fallthru
        _
    $region6: #{tpu_custom_call.1} parent=1 // loop_footer
      %s21 = sadd.s32 1, %s17
    $region7: #{tpu_custom_call.1} parent=1 // loop_footer_branch
      %16 = sbr.rel target = $region3
    $region8: #{tpu_custom_call.1} parent=1 // loop_exit
      _
    %885 = vsyncpa [#allocation3], 1
    %s886 = scalar_lea.sflag [#allocation3], 1
    %887 = vsyncpa %s886, 1

</llo_original>
